<compile_context>
chip_gen: v5e
topology: v5e:2x2
jax: 0.10.0
libtpu: 0.0.40
codegen_flags: <defaults>
</compile_context>

<pallas_src>
import functools

import jax
import jax.numpy as jnp
from jax.experimental import pallas as pl
from jax.experimental.pallas import tpu as pltpu


def _attention_body(q, k, v, mask, out_ref, attn_ref):
    # q already carries the 1/temperature scale.
    # scores: [TB, TQ, Lk]; contract on the shared last dim (no materialized k transpose).
    s = jnp.einsum("bqd,bkd->bqk", q, k, preferred_element_type=jnp.float32)
    if mask is not None:
        s = jnp.where(mask != 0, jnp.float32(-10000000000.0), s)

    # softmax over the last dim (dim=2 of [B, Lq, Lk])
    s_max = jnp.max(s, axis=-1, keepdims=True)
    p = jnp.exp(s - s_max)
    denom = jnp.sum(p, axis=-1, keepdims=True)
    attn = p * pl.reciprocal(denom, approx=True)  # EUP vrcp; otherwise-idle VLIW slot

    attn_ref[...] = attn.astype(attn_ref.dtype)

    # output = attn @ v ; dropout is identity in eval mode
    out = jnp.einsum("bqk,bkd->bqd", attn.astype(v.dtype), v,
                     preferred_element_type=jnp.float32)
    out_ref[...] = out.astype(out_ref.dtype)


def _sdpa_kernel_masked(q_ref, k_ref, v_ref, mask_ref, out_ref, attn_ref, *,
                        inv_temperature):
    q = q_ref[...] * jnp.asarray(inv_temperature, dtype=q_ref.dtype)
    _attention_body(q, k_ref[...], v_ref[...], mask_ref[...], out_ref, attn_ref)


def _sdpa_kernel_nomask(q_ref, k_ref, v_ref, out_ref, attn_ref, *, inv_temperature):
    q = q_ref[...] * jnp.asarray(inv_temperature, dtype=q_ref.dtype)
    _attention_body(q, k_ref[...], v_ref[...], None, out_ref, attn_ref)


def _default_vmem_limit_bytes():
    # v5e/v6e: 128 MiB physical -> 96 MiB scoped; v7x: 64 MiB physical -> 48 MiB scoped.
    cap = 64 * 1024 * 1024
    try:
        info = pltpu.get_tpu_info()
        cap = int(getattr(info, "vmem_capacity_bytes", cap))
    except Exception:
        pass
    return int(min(cap * 3 // 4, 96 * 1024 * 1024))


def _choose_tiles(B, Lq, Lk, D, Dv, q_it, k_it, v_it, o_it, a_it, has_mask,
                  budget_bytes):
    """Pick (batch_tile, q_tile) so the ~double-buffered VMEM footprint fits the budget."""

    def footprint(tb, tq):
        per_b = (tq * D * q_it            # q tile
                 + Lk * D * k_it          # resident K
                 + Lk * Dv * v_it         # resident V
                 + tq * Dv * o_it         # output tile
                 + tq * Lk * a_it         # attn tile
                 + (tq * Lk if has_mask else 0))  # int8 mask tile
        return 2 * tb * per_b             # ~2x for double buffering

    tq = Lq
    # shrink Lq tile in multiples of 32 (legal second-to-last block dim for f32/bf16/int8)
    while tq > 32 and footprint(1, tq) > budget_bytes:
        tq = max(32, (tq // 2) // 32 * 32)
    tb = B
    while tb > 1 and footprint(tb, tq) > budget_bytes:
        tb = max(1, tb // 2)
    return tb, tq


def scaled_dot_product_attention(q, k, v, temperature, mask=None):
    """q: [B, Lq, D], k: [B, Lk, D], v: [B, Lk, Dv], mask: optional [B, Lq, Lk]."""
    B, Lq, D = q.shape
    _, Lk, _ = k.shape
    Dv = v.shape[-1]

    out_dtype = q.dtype
    attn_dtype = q.dtype
    has_mask = mask is not None
    inv_temperature = 1.0 / float(temperature)

    vmem_limit = _default_vmem_limit_bytes()
    TB, TQ = _choose_tiles(
        B, Lq, Lk, D, Dv,
        q.dtype.itemsize, k.dtype.itemsize, v.dtype.itemsize,
        jnp.dtype(out_dtype).itemsize, jnp.dtype(attn_dtype).itemsize,
        has_mask, budget_bytes=vmem_limit // 2)

    grid = (pl.cdiv(B, TB), pl.cdiv(Lq, TQ))

    in_specs = [
        pl.BlockSpec((TB, TQ, D), lambda b, i: (b, i, 0)),
        # K/V stay resident across the Lq-tile axis (index_map ignores i -> no re-DMA).
        pl.BlockSpec((TB, Lk, D), lambda b, i: (b, 0, 0)),
        pl.BlockSpec((TB, Lk, Dv), lambda b, i: (b, 0, 0)),
    ]
    inputs = [q, k, v]
    if has_mask:
        in_specs.append(pl.BlockSpec((TB, TQ, Lk), lambda b, i: (b, i, 0)))
        inputs.append((mask != 0).astype(jnp.int8))  # 4x less HBM traffic than f32 mask
        kernel = functools.partial(_sdpa_kernel_masked,
                                   inv_temperature=inv_temperature)
    else:
        kernel = functools.partial(_sdpa_kernel_nomask,
                                   inv_temperature=inv_temperature)

    out_specs = [
        pl.BlockSpec((TB, TQ, Dv), lambda b, i: (b, i, 0)),
        pl.BlockSpec((TB, TQ, Lk), lambda b, i: (b, i, 0)),
    ]
    out_shapes = (
        jax.ShapeDtypeStruct((B, Lq, Dv), out_dtype),
        jax.ShapeDtypeStruct((B, Lq, Lk), attn_dtype),
    )

    bytes_accessed = (
        q.size * q.dtype.itemsize
        + k.size * k.dtype.itemsize
        + v.size * v.dtype.itemsize
        + (B * Lq * Lk if has_mask else 0)                      # int8 mask
        + B * Lq * Dv * jnp.dtype(out_dtype).itemsize           # output
        + B * Lq * Lk * jnp.dtype(attn_dtype).itemsize)         # attn
    cost = pl.CostEstimate(
        flops=2 * B * Lq * Lk * (D + Dv),
        transcendentals=B * Lq * Lk,
        bytes_accessed=bytes_accessed)

    grid_spec = pltpu.PrefetchScalarGridSpec(
        num_scalar_prefetch=0,
        grid=grid,
        in_specs=in_specs,
        out_specs=out_specs,
    )

    return pl.pallas_call(
        kernel,
        out_shape=out_shapes,
        grid_spec=grid_spec,
        cost_estimate=cost,
        compiler_params=pltpu.CompilerParams(
            dimension_semantics=("parallel", "parallel"),
            vmem_limit_bytes=vmem_limit,
        ),
    )(*inputs)


def _reference(q, k, v, temperature, mask=None):
    attn = jnp.einsum("bqd,bkd->bqk", q, k) / temperature
    if mask is not None:
        attn = jnp.where(mask, -10000000000.0, attn)
    attn = jax.nn.softmax(attn, axis=2)
    out = jnp.einsum("bqk,bkd->bqd", attn, v)
    return out, attn


if __name__ == "__main__":
    key = jax.random.PRNGKey(0)
    kq, kk, kv, km = jax.random.split(key, 4)

    B, Lq, Lk, D, Dv = 2, 8, 8, 32, 32
    temperature = float(D) ** 0.5

    q = jax.random.normal(kq, (B, Lq, D), dtype=jnp.float32)
    k = jax.random.normal(kk, (B, Lk, D), dtype=jnp.float32)
    v = jax.random.normal(kv, (B, Lk, Dv), dtype=jnp.float32)
    mask = jax.random.bernoulli(km, p=0.25, shape=(B, Lq, Lk))

    out, attn = scaled_dot_product_attention(q, k, v, temperature, mask=mask)
    out = jax.block_until_ready(out)
    attn = jax.block_until_ready(attn)

    out_ref, attn_ref = _reference(q, k, v, temperature, mask=mask)
    # Tolerance is looser than f32 exact because of the approximate (EUP) reciprocal
    # in the softmax normalization; logic errors would show up at O(0.1) or worse.
    assert jnp.allclose(out, out_ref, atol=1e-2, rtol=1e-2), "output mismatch"
    assert jnp.allclose(attn, attn_ref, atol=1e-2, rtol=1e-2), "attn mismatch"

    # also exercise the dedicated no-mask kernel (no dense mask streamed from HBM)
    out2, attn2 = scaled_dot_product_attention(q, k, v, temperature, mask=None)
    out2 = jax.block_until_ready(out2)
    attn2 = jax.block_until_ready(attn2)
    out2_ref, attn2_ref = _reference(q, k, v, temperature, mask=None)
    assert jnp.allclose(out2, out2_ref, atol=1e-2, rtol=1e-2)
    assert jnp.allclose(attn2, attn2_ref, atol=1e-2, rtol=1e-2)

    print("KERNEL_OK")
</pallas_src>

<mosaic_0001>
module attributes {stable_mosaic.version = 11 : i64} {
  func.func @_sdpa_kernel_masked(%arg0: i32, %arg1: i32, %arg2: memref<2x8x32xf32, #tpu.memory_space<vmem>>, %arg3: memref<2x8x32xf32, #tpu.memory_space<vmem>>, %arg4: memref<2x8x32xf32, #tpu.memory_space<vmem>>, %arg5: memref<2x8x8xi8, #tpu.memory_space<vmem>>, %arg6: memref<2x8x32xf32, #tpu.memory_space<vmem>>, %arg7: memref<2x8x8xf32, #tpu.memory_space<vmem>>) attributes {dimension_semantics = [#tpu.dimension_semantics<parallel>, #tpu.dimension_semantics<parallel>], iteration_bounds = array<i64: 1, 1>, scalar_prefetch = 0 : i64, scratch_operands = 0 : i64, tpu.core_type = #tpu.core_type<tc>, window_params = [{transform_indices = @transform_0, window_bounds = array<i64: 2, 8, 32>}, {transform_indices = @transform_1, window_bounds = array<i64: 2, 8, 32>}, {transform_indices = @transform_2, window_bounds = array<i64: 2, 8, 32>}, {transform_indices = @transform_3, window_bounds = array<i64: 2, 8, 8>}, {transform_indices = @transform_4, window_bounds = array<i64: 2, 8, 32>}, {transform_indices = @transform_5, window_bounds = array<i64: 2, 8, 8>}]} {
    %c0 = arith.constant 0 : index
    %c0_0 = arith.constant 0 : index
    %c0_1 = arith.constant 0 : index
    %0 = vector.load %arg2[%c0, %c0_0, %c0_1] : memref<2x8x32xf32, #tpu.memory_space<vmem>>, vector<2x8x32xf32>
    %cst = arith.constant 0.176776692 : f32
    %1 = vector.broadcast %cst : f32 to vector<2x8x32xf32>
    %2 = arith.mulf %0, %1 : vector<2x8x32xf32>
    %c0_2 = arith.constant 0 : index
    %c0_3 = arith.constant 0 : index
    %c0_4 = arith.constant 0 : index
    %3 = vector.load %arg3[%c0_2, %c0_3, %c0_4] : memref<2x8x32xf32, #tpu.memory_space<vmem>>, vector<2x8x32xf32>
    %c0_5 = arith.constant 0 : index
    %c0_6 = arith.constant 0 : index
    %c0_7 = arith.constant 0 : index
    %4 = vector.load %arg4[%c0_5, %c0_6, %c0_7] : memref<2x8x32xf32, #tpu.memory_space<vmem>>, vector<2x8x32xf32>
    %c0_8 = arith.constant 0 : index
    %c0_9 = arith.constant 0 : index
    %c0_10 = arith.constant 0 : index
    %5 = vector.load %arg5[%c0_8, %c0_9, %c0_10] : memref<2x8x8xi8, #tpu.memory_space<vmem>>, vector<2x8x8xi8>
    "tpu.trace_start"() <{level = 10 : i32, message = "bqd,bkd->bqk"}> : () -> ()
    %cst_11 = arith.constant dense<0.000000e+00> : vector<2x8x8xf32>
    %6 = tpu.matmul %2, %3, %cst_11 {dimension_numbers = #tpu.dot_dimension_numbers<[2], [2], [1], [1], [0, 0, 0, 1, 1, 1], [0], [0]>} : vector<2x8x32xf32>, vector<2x8x32xf32>, vector<2x8x8xf32> -> vector<2x8x8xf32>
    %c0_i8 = arith.constant 0 : i8
    "tpu.trace_stop"() : () -> ()
    %7 = vector.broadcast %c0_i8 : i8 to vector<2x8x8xi8>
    %8 = arith.cmpi ne, %5, %7 : vector<2x8x8xi8>
    %cst_12 = arith.constant -1.000000e+10 : f32
    %9 = vector.broadcast %cst_12 : f32 to vector<2x8x8xf32>
    %10 = arith.select %8, %9, %6 : vector<2x8x8xi1>, vector<2x8x8xf32>
    %cst_13 = arith.constant dense<0xFF800000> : vector<2x8xf32>
    %11 = vector.multi_reduction <maximumf>, %10, %cst_13 [2] : vector<2x8x8xf32> to vector<2x8xf32>
    %12 = vector.shape_cast %11 : vector<2x8xf32> to vector<2x8x1xf32>
    %13 = vector.broadcast %12 : vector<2x8x1xf32> to vector<2x8x8xf32>
    %14 = arith.subf %10, %13 : vector<2x8x8xf32>
    %15 = math.exp %14 : vector<2x8x8xf32>
    %cst_14 = arith.constant dense<0.000000e+00> : vector<2x8xf32>
    %16 = vector.multi_reduction <add>, %15, %cst_14 [2] : vector<2x8x8xf32> to vector<2x8xf32>
    %17 = vector.shape_cast %16 : vector<2x8xf32> to vector<2x8x1xf32>
    %18 = tpu.reciprocal %17 {approx = true} : vector<2x8x1xf32> -> vector<2x8x1xf32>
    %19 = vector.broadcast %18 : vector<2x8x1xf32> to vector<2x8x8xf32>
    %20 = arith.mulf %15, %19 : vector<2x8x8xf32>
    %c0_15 = arith.constant 0 : index
    %c0_16 = arith.constant 0 : index
    %c0_17 = arith.constant 0 : index
    %21 = vector.load %arg7[%c0_15, %c0_16, %c0_17] : memref<2x8x8xf32, #tpu.memory_space<vmem>>, vector<2x8x8xf32>
    tpu.vector_store %arg7[%c0_15, %c0_16, %c0_17], %20 {strides = array<i32>} : memref<2x8x8xf32, #tpu.memory_space<vmem>>, vector<2x8x8xf32>,
    "tpu.trace_start"() <{level = 10 : i32, message = "bqk,bkd->bqd"}> : () -> ()
    %cst_18 = arith.constant dense<0.000000e+00> : vector<2x8x32xf32>
    %22 = tpu.matmul %20, %4, %cst_18 {dimension_numbers = #tpu.dot_dimension_numbers<[2], [1], [1], [2], [0, 0, 0, 1, 1, 2], [0], [0]>} : vector<2x8x8xf32>, vector<2x8x32xf32>, vector<2x8x32xf32> -> vector<2x8x32xf32>
    "tpu.trace_stop"() : () -> ()
    %c0_19 = arith.constant 0 : index
    %c0_20 = arith.constant 0 : index
    %c0_21 = arith.constant 0 : index
    %23 = vector.load %arg6[%c0_19, %c0_20, %c0_21] : memref<2x8x32xf32, #tpu.memory_space<vmem>>, vector<2x8x32xf32>
    tpu.vector_store %arg6[%c0_19, %c0_20, %c0_21], %22 {strides = array<i32>} : memref<2x8x32xf32, #tpu.memory_space<vmem>>, vector<2x8x32xf32>,
    return
  }
  func.func @transform_0(%arg0: i32, %arg1: i32) -> (i32, i32, i32) {
    %c0_i32 = arith.constant 0 : i32
    %c0_i32_0 = arith.constant 0 : i32
    return %arg0, %arg1, %c0_i32 : i32, i32, i32
  }
  func.func @transform_1(%arg0: i32, %arg1: i32) -> (i32, i32, i32) {
    %c0_i32 = arith.constant 0 : i32
    %c0_i32_0 = arith.constant 0 : i32
    %c0_i32_1 = arith.constant 0 : i32
    return %arg0, %c0_i32, %c0_i32_0 : i32, i32, i32
  }
  func.func @transform_2(%arg0: i32, %arg1: i32) -> (i32, i32, i32) {
    %c0_i32 = arith.constant 0 : i32
    %c0_i32_0 = arith.constant 0 : i32
    %c0_i32_1 = arith.constant 0 : i32
    return %arg0, %c0_i32, %c0_i32_0 : i32, i32, i32
  }
  func.func @transform_3(%arg0: i32, %arg1: i32) -> (i32, i32, i32) {
    %c0_i32 = arith.constant 0 : i32
    %c0_i32_0 = arith.constant 0 : i32
    return %arg0, %arg1, %c0_i32 : i32, i32, i32
  }
  func.func @transform_4(%arg0: i32, %arg1: i32) -> (i32, i32, i32) {
    %c0_i32 = arith.constant 0 : i32
    %c0_i32_0 = arith.constant 0 : i32
    return %arg0, %arg1, %c0_i32 : i32, i32, i32
  }
  func.func @transform_5(%arg0: i32, %arg1: i32) -> (i32, i32, i32) {
    %c0_i32 = arith.constant 0 : i32
    %c0_i32_0 = arith.constant 0 : i32
    return %arg0, %arg1, %c0_i32 : i32, i32, i32
  }
}

</mosaic_0001>

<llo_original>
// kernel: tpu_custom_call.1
$region0: #{tpu_custom_call.1}
  #allocation0 [shape = 'u32[]', space=smem, size = 0x4, offset = 0x4, fixed_abs, tag = 'smem constant byte address 0x4 - core index']
  #allocation1 [shape = 'u32[72,128]{1,0:T(1,128)}', space=vmem, size = 0x9000, scoped, tag = 'internal scratch']
  %s0 = inlined_call_operand.hbm [shape: f32[2,8,32], index: 0, kind: input, shape index: {}]
  %s1 = inlined_call_operand.hbm [shape: f32[2,8,32], index: 1, kind: input, shape index: {}]
  %s2 = inlined_call_operand.hbm [shape: f32[2,8,32], index: 2, kind: input, shape index: {}]
  %s3 = inlined_call_operand.hbm [shape: s8[2,8,8], index: 3, kind: input, shape index: {}]
  %s4 = inlined_call_operand.hbm [shape: f32[2,8,32], index: 4, kind: output, shape index: {0}]
  %s5 = inlined_call_operand.hbm [shape: f32[2,8,8], index: 5, kind: output, shape index: {1}]
  %6 = xla_tuple %s4, %s5
  %s7 = sld [smem:[#allocation0]]
  $region50: #{tpu_custom_call.1} parent=0
    _
  %s9 = ssub.s32 1, %s7
  %s10 = scalar_select 0, %s9, %s7
  $region1: #{tpu_custom_call.1} parent=0
    #allocation2 [shape = 'u8[8192]{0}', space=vmem, size = 0x2000, scoped, tag = 'input window, operand 0, single buffered']
    #allocation3 [shape = 's32[1]{0}', space=sflag, size = 0x4, scoped, tag = 'scoped memory for tpu_custom_call.1']
    #allocation4 [shape = 's32[1]{0}', space=sflag, size = 0x4, scoped, tag = 'scoped memory for tpu_custom_call.1']
    #allocation5 [shape = 'u8[8192]{0}', space=vmem, size = 0x2000, scoped, tag = 'input window, operand 1, single buffered']
    #allocation6 [shape = 's32[1]{0}', space=sflag, size = 0x4, scoped, tag = 'scoped memory for tpu_custom_call.1']
    #allocation7 [shape = 'u8[8192]{0}', space=vmem, size = 0x2000, scoped, tag = 'input window, operand 2, single buffered']
    #allocation8 [shape = 'u8[2048]{0}', space=vmem, size = 0x800, scoped, tag = 'input window, operand 3, single buffered']
    #allocation9 [shape = 's32[1]{0}', space=sflag, size = 0x4, scoped, tag = 'scoped memory for tpu_custom_call.1']
    #allocation10 [shape = 'u8[8192]{0}', space=vmem, size = 0x2000, scoped, tag = 'output window, operand 0, single buffered']
    #allocation11 [shape = 'u8[8192]{0}', space=vmem, size = 0x2000, scoped, tag = 'output window, operand 1, single buffered']
    #allocation12 [shape = 's32[1]{0}', space=sflag, size = 0x4, scoped, tag = 'scoped memory for tpu_custom_call.1']
    %11 = vsyncpa [#allocation3], 0
    %12 = vsyncpa [#allocation6], 0
    %13 = vsyncpa [#allocation9], 0
    %14 = vsyncpa [#allocation4], 0
    %15 = vsyncpa [#allocation12], 0
    // Predicated region
    $region2: #{tpu_custom_call.1} parent=1 // pred_check
      _
    $region3: #{tpu_custom_call.1} parent=1 // pred_check_branch
      %17 = sbr.rel (0) target = $region5
    $region4: #{tpu_custom_call.1} parent=1 // pred_region
      %19 = vsyncadd [#allocation3], 0
      %s20 = sshll.u32 %s0, 4
      %s21 = int_to_ptr.hbm [resolvable:$true] %s20
      %s22 = sshll.u32 [#allocation2], 4
      %s23 = int_to_ptr.vmem [resolvable:$true] %s22
      %28 = dma.hbm_to_vmem [thread:$0]  %s21, 256, %s23, [#allocation3], 128, 128, 8
    $region5: #{tpu_custom_call.1} parent=1 // pred_fallthru
      _
    // Predicated region
    $region6: #{tpu_custom_call.1} parent=1 // pred_check
      _
    $region7: #{tpu_custom_call.1} parent=1 // pred_check_branch
      %30 = sbr.rel (0) target = $region9
    $region8: #{tpu_custom_call.1} parent=1 // pred_region
      %32 = vsyncadd [#allocation6], 0
      %s33 = sshll.u32 %s1, 4
      %s34 = int_to_ptr.hbm [resolvable:$true] %s33
      %s35 = sshll.u32 [#allocation5], 4
      %s36 = int_to_ptr.vmem [resolvable:$true] %s35
      %41 = dma.hbm_to_vmem [thread:$0]  %s34, 256, %s36, [#allocation6], 128, 128, 8
    $region9: #{tpu_custom_call.1} parent=1 // pred_fallthru
      _
    // Predicated region
    $region10: #{tpu_custom_call.1} parent=1 // pred_check
      _
    $region11: #{tpu_custom_call.1} parent=1 // pred_check_branch
      %43 = sbr.rel (0) target = $region13
    $region12: #{tpu_custom_call.1} parent=1 // pred_region
      %45 = vsyncadd [#allocation6], 0
      %s46 = sshll.u32 %s2, 4
      %s47 = int_to_ptr.hbm [resolvable:$true] %s46
      %s48 = sshll.u32 [#allocation7], 4
      %s49 = int_to_ptr.vmem [resolvable:$true] %s48
      %54 = dma.hbm_to_vmem [thread:$0]  %s47, 256, %s49, [#allocation6], 128, 128, 8
    $region13: #{tpu_custom_call.1} parent=1 // pred_fallthru
      _
    // Predicated region
    $region14: #{tpu_custom_call.1} parent=1 // pred_check
      _
    $region15: #{tpu_custom_call.1} parent=1 // pred_check_branch
      %56 = sbr.rel (0) target = $region17
    $region16: #{tpu_custom_call.1} parent=1 // pred_region
      %58 = vsyncadd [#allocation9], 0
      %s59 = sshll.u32 %s3, 4
      %s60 = int_to_ptr.hbm [resolvable:$true] %s59
      %s61 = sshll.u32 [#allocation8], 4
      %s62 = int_to_ptr.vmem [resolvable:$true] %s61
      %67 = dma.hbm_to_vmem [thread:$0]  %s60, 64, %s62, [#allocation9], 32, 32, 2
    $region17: #{tpu_custom_call.1} parent=1 // pred_fallthru
      _
    // Predicated region
    $region18: #{tpu_custom_call.1} parent=1 // pred_check
      _
    $region19: #{tpu_custom_call.1} parent=1 // pred_check_branch
      %69 = sbr.rel (0) target = $region21
    $region20: #{tpu_custom_call.1} parent=1 // pred_region
      %71 = dma.done [#allocation3], 256
    $region21: #{tpu_custom_call.1} parent=1 // pred_fallthru
      _
    // Predicated region
    $region22: #{tpu_custom_call.1} parent=1 // pred_check
      _
    $region23: #{tpu_custom_call.1} parent=1 // pred_check_branch
      %73 = sbr.rel (0) target = $region25
    $region24: #{tpu_custom_call.1} parent=1 // pred_region
      %75 = dma.done [#allocation6], 256
    $region25: #{tpu_custom_call.1} parent=1 // pred_fallthru
      _
    // Predicated region
    $region26: #{tpu_custom_call.1} parent=1 // pred_check
      _
    $region27: #{tpu_custom_call.1} parent=1 // pred_check_branch
      %77 = sbr.rel (0) target = $region29
    $region28: #{tpu_custom_call.1} parent=1 // pred_region
      %79 = dma.done [#allocation6], 256
    $region29: #{tpu_custom_call.1} parent=1 // pred_fallthru
      _
    // Predicated region
    $region30: #{tpu_custom_call.1} parent=1 // pred_check
      _
    $region31: #{tpu_custom_call.1} parent=1 // pred_check_branch
      %81 = sbr.rel (0) target = $region33
    $region32: #{tpu_custom_call.1} parent=1 // pred_region
      %83 = dma.done [#allocation9], 64
    $region33: #{tpu_custom_call.1} parent=1 // pred_fallthru
      _
    %v86 = vld [vmem:[#allocation2] sm:$0xff]
    %v87 = vld [vmem:[#allocation2 + $0x8] sm:$0xff]
    %v88 = vmul.f32 %v86, 0.17677669
    %v89 = vmul.f32 %v87, 0.17677669
    %v90 = vld [vmem:[#allocation5] sm:$0xff]
    %v91 = vld [vmem:[#allocation5 + $0x8] sm:$0xff]
    %v92 = vld [vmem:[#allocation7] sm:$0xff]
    %v93 = vld [vmem:[#allocation7 + $0x8] sm:$0xff]
    %v94 = vld [vmem:[#allocation8] sm:$0x3]
    %v95 = vld [vmem:[#allocation8 + $0x2] sm:$0x3]
    %vm96 = vcmask 261120
    %v98 = vsel %vm96, %v88, 0
    %v101 = vsel %vm96, %v90, 0
    %103 = vmatpush.xpose.msra.mxu0 0.0
    %104 = vmatpush.xpose.msra.mxu0 0.0
    %105 = vmatpush.xpose.msra.mxu0 0.0
    %106 = vmatpush.xpose.msra.mxu0 0.0
    %107 = vmatpush.xpose.msra.mxu0 0.0
    %108 = vmatpush.xpose.msra.mxu0 0.0
    %109 = vmatpush.xpose.msra.mxu0 0.0
    %110 = vmatpush.xpose.msra.mxu0 0.0
    %111 = vmatpush.xpose.msra.mxu0 0.0
    %112 = vmatpush.xpose.msra.mxu0 0.0
    %113 = vmatpush.xpose.msra.mxu0 0.0
    %114 = vmatpush.xpose.msra.mxu0 0.0
    %115 = vmatpush.xpose.msra.mxu0 0.0
    %116 = vmatpush.xpose.msra.mxu0 0.0
    %117 = vmatpush.xpose.msra.mxu0 0.0
    %118 = vmatpush.xpose.msra.mxu0 %v101
    %119 = vmatmul.f32.gmra.mxu0 %v98
    %v120 = vpop.f32.mrf.mxu0
    %v121 = vadd.f32 0.0, %v120
    %122 = vdwg.mxu0
    %v124 = vsel %vm96, %v89, 0
    %v127 = vsel %vm96, %v91, 0
    %129 = vmatpush.xpose.msra.mxu0 0.0
    %130 = vmatpush.xpose.msra.mxu0 0.0
    %131 = vmatpush.xpose.msra.mxu0 0.0
    %132 = vmatpush.xpose.msra.mxu0 0.0
    %133 = vmatpush.xpose.msra.mxu0 0.0
    %134 = vmatpush.xpose.msra.mxu0 0.0
    %135 = vmatpush.xpose.msra.mxu0 0.0
    %136 = vmatpush.xpose.msra.mxu0 0.0
    %137 = vmatpush.xpose.msra.mxu0 0.0
    %138 = vmatpush.xpose.msra.mxu0 0.0
    %139 = vmatpush.xpose.msra.mxu0 0.0
    %140 = vmatpush.xpose.msra.mxu0 0.0
    %141 = vmatpush.xpose.msra.mxu0 0.0
    %142 = vmatpush.xpose.msra.mxu0 0.0
    %143 = vmatpush.xpose.msra.mxu0 0.0
    %144 = vmatpush.xpose.msra.mxu0 %v127
    %145 = vmatmul.f32.gmra.mxu0 %v124
    %v146 = vpop.f32.mrf.mxu0
    %v147 = vadd.f32 0.0, %v146
    %148 = vdwg.mxu0
    %vm149 = vnez %v94
    %vm150 = vnez %v95
    %v151 = vsel %vm149, 16843009, 0
    %v152 = vsel %vm150, 16843009, 0
    %v153 = vunpack.c.0.s8 %v151
    %v154 = vunpack.c.0.s8 %v152
    %vm155 = vcmp.ne.s32.totalorder %v153, 0
    %vm156 = vcmp.ne.s32.totalorder %v154, 0
    %v157 = vsel %vm155, -1e+10, %v121
    %v158 = vsel %vm156, -1e+10, %v147
    %vm159 = vcmask 64512
    %v160 = vsel %vm159, %v157, -inf
    %161 = vmax.xlane.f32.xlu0 %v160
    %v162 = vpop.xlane.xlu0 %161
    %v163 = vsel %vm159, %v158, -inf
    %164 = vmax.xlane.f32.xlu0 %v163
    %v165 = vpop.xlane.xlu0 %164
    %v166 = vsub.f32 %v157, %v162
    %v167 = vsub.f32 %v158, %v165
    %v168 = vmul.f32 %v166, 1.442695
    %v169 = vpow.pop %v168
    %v170 = vmul.f32 %v167, 1.442695
    %v171 = vpow.pop %v170
    %v172 = vsel %vm159, %v169, 0.0
    %173 = vadd.xlane.f32.xlu0 %v172
    %v174 = vpop.xlane.xlu0 %173
    %v175 = vsel %vm159, %v171, 0.0
    %176 = vadd.xlane.f32.xlu0 %v175
    %v177 = vpop.xlane.xlu0 %176
    %v178 = vrcp.pop %v174
    %v179 = vrcp.pop %v177
    %v180 = vmul.f32 %v169, %v178
    %v181 = vmul.f32 %v171, %v179
    %182 = vst.msk [vmem:[#allocation11] sm:$0xff] %vm159, %v180
    %183 = vst.msk [vmem:[#allocation11 + $0x8] sm:$0xff] %vm159, %v181
    %v185 = vsel %vm159, %v180, 0
    %187 = vmatpush.msra.mxu0 0.0
    %188 = vmatpush.msra.mxu0 0.0
    %189 = vmatpush.msra.mxu0 0.0
    %190 = vmatpush.msra.mxu0 0.0
    %191 = vmatpush.msra.mxu0 0.0
    %192 = vmatpush.msra.mxu0 0.0
    %193 = vmatpush.msra.mxu0 0.0
    %194 = vmatpush.msra.mxu0 0.0
    %195 = vmatpush.msra.mxu0 0.0
    %196 = vmatpush.msra.mxu0 0.0
    %197 = vmatpush.msra.mxu0 0.0
    %198 = vmatpush.msra.mxu0 0.0
    %199 = vmatpush.msra.mxu0 0.0
    %200 = vmatpush.msra.mxu0 0.0
    %201 = vmatpush.msra.mxu0 0.0
    %202 = vmatpush.msra.mxu0 %v92
    %203 = vmatmul.f32.gmra.mxu0 %v185
    %v204 = vpop.f32.mrf.mxu0
    %v205 = vadd.f32 0.0, %v204
    %206 = vdwg.mxu0
    %v208 = vsel %vm159, %v181, 0
    %210 = vmatpush.msra.mxu0 0.0
    %211 = vmatpush.msra.mxu0 0.0
    %212 = vmatpush.msra.mxu0 0.0
    %213 = vmatpush.msra.mxu0 0.0
    %214 = vmatpush.msra.mxu0 0.0
    %215 = vmatpush.msra.mxu0 0.0
    %216 = vmatpush.msra.mxu0 0.0
    %217 = vmatpush.msra.mxu0 0.0
    %218 = vmatpush.msra.mxu0 0.0
    %219 = vmatpush.msra.mxu0 0.0
    %220 = vmatpush.msra.mxu0 0.0
    %221 = vmatpush.msra.mxu0 0.0
    %222 = vmatpush.msra.mxu0 0.0
    %223 = vmatpush.msra.mxu0 0.0
    %224 = vmatpush.msra.mxu0 0.0
    %225 = vmatpush.msra.mxu0 %v93
    %226 = vmatmul.f32.gmra.mxu0 %v208
    %v227 = vpop.f32.mrf.mxu0
    %v228 = vadd.f32 0.0, %v227
    %229 = vdwg.mxu0
    %230 = vst.msk [vmem:[#allocation10] sm:$0xff] %vm96, %v205
    %231 = vst.msk [vmem:[#allocation10 + $0x8] sm:$0xff] %vm96, %v228
    // Predicated region
    $region34: #{tpu_custom_call.1} parent=1 // pred_check
      _
    $region35: #{tpu_custom_call.1} parent=1 // pred_check_branch
      %233 = sbr.rel (0) target = $region37
    $region36: #{tpu_custom_call.1} parent=1 // pred_region
      %235 = vsyncadd [#allocation4], 0
      %s236 = sshll.u32 [#allocation10], 4
      %s237 = int_to_ptr.vmem [resolvable:$true] %s236
      %s238 = sshll.u32 %s4, 4
      %s239 = int_to_ptr.hbm [resolvable:$true] %s238
      %244 = dma.vmem_to_hbm [thread:$0]  %s237, 256, %s239, [#allocation4], 128, 128, 8
    $region37: #{tpu_custom_call.1} parent=1 // pred_fallthru
      _
    // Predicated region
    $region38: #{tpu_custom_call.1} parent=1 // pred_check
      _
    $region39: #{tpu_custom_call.1} parent=1 // pred_check_branch
      %246 = sbr.rel (0) target = $region41
    $region40: #{tpu_custom_call.1} parent=1 // pred_region
      %248 = vsyncadd [#allocation12], 0
      %s249 = sshll.u32 [#allocation11], 4
      %s250 = int_to_ptr.vmem [resolvable:$true] %s249
      %s251 = sshll.u32 %s5, 4
      %s252 = int_to_ptr.hbm [resolvable:$true] %s251
      %257 = dma.vmem_to_hbm [thread:$0]  %s250, 256, %s252, [#allocation12], 128, 128, 8
    $region41: #{tpu_custom_call.1} parent=1 // pred_fallthru
      _
    // Predicated region
    $region42: #{tpu_custom_call.1} parent=1 // pred_check
      _
    $region43: #{tpu_custom_call.1} parent=1 // pred_check_branch
      %259 = sbr.rel (0) target = $region45
    $region44: #{tpu_custom_call.1} parent=1 // pred_region
      %261 = dma.done [#allocation4], 256
    $region45: #{tpu_custom_call.1} parent=1 // pred_fallthru
      _
    // Predicated region
    $region46: #{tpu_custom_call.1} parent=1 // pred_check
      _
    $region47: #{tpu_custom_call.1} parent=1 // pred_check_branch
      %263 = sbr.rel (0) target = $region49
    $region48: #{tpu_custom_call.1} parent=1 // pred_region
      %265 = dma.done [#allocation12], 256
    $region49: #{tpu_custom_call.1} parent=1 // pred_fallthru
      _
    %266 = vsyncpa [#allocation3], 1
    %267 = vsyncpa [#allocation6], 1
    %268 = vsyncpa [#allocation9], 1
    %269 = vsyncpa [#allocation4], 1
    %270 = vsyncpa [#allocation12], 1

</llo_original>
